<compile_context>
chip_gen: v5e
topology: v5e:2x2
jax: 0.10.0
libtpu: 0.0.40
codegen_flags: <defaults>
</compile_context>

<pallas_src>
import functools

import jax
import jax.numpy as jnp
from jax.experimental import pallas as pl
from jax.experimental.pallas import tpu as pltpu


def _round_up(x, m):
    return ((x + m - 1) // m) * m


def _workset_bytes(tn, j, itemsize):
    """Rough per-core VMEM working-set estimate for a (tn, j) row tile."""
    j_lanes = _round_up(j, 128)
    logits_bufs = 2 * tn * j_lanes * itemsize        # native-dtype tile, double-buffered
    temporaries = 5 * tn * j_lanes * 4               # x_f32, z, w, select temp, exp temp
    target_bufs = 2 * tn * 128 * 4                   # (tn,1) int32 column, lane-padded
    tables = 2 * (_round_up(j, 8) + 8) * j_lanes * 4  # cls_probs^T + row sums (resident)
    acc = tn * 128 * 4                               # (tn,1) f32 accumulator scratch
    return logits_bufs + temporaries + target_bufs + tables + acc


def _choose_tile_rows(n, j, itemsize, max_block_rows):
    """Row-tile size: ~2 MiB of logits per tile, bounded by a ~40 MiB VMEM budget."""
    target_tile_bytes = 2 << 20
    tn = max(32, target_tile_bytes // max(1, j * itemsize))
    tn = min(tn, 4096, max(32, max_block_rows))
    tn = max(32, (tn // 32) * 32)        # sublane-packing safe for f32 / bf16 / int8
    while tn > 32 and _workset_bytes(tn, j, itemsize) > (40 << 20):
        tn = max(32, ((tn // 2) // 32) * 32)
    return tn


def _custom_targets_ce_kernel(logits_ref, target_ref, cpt_ref, rowsum_ref,
                              out_ref, acc_ref, *, eta, n_valid, tn,
                              tiles_per_split):
    c = pl.program_id(0)              # TensorCore split (parallel)
    i = pl.program_id(1)              # row tile within the split (reduction)

    @pl.when(i == 0)
    def _init():
        acc_ref[...] = jnp.zeros_like(acc_ref)
        out_ref[...] = jnp.zeros_like(out_ref)

    x = logits_ref[...].astype(jnp.float32)          # (tn, J); cast AFTER the load
    t = target_ref[...]                              # (tn, 1) int32
    rows, j = x.shape

    # stable per-row log-sum-exp (exp/log on the EUP, lane reductions on XLU)
    m = jnp.max(x, axis=-1, keepdims=True)
    lse = jnp.log(jnp.sum(jnp.exp(x - m), axis=-1, keepdims=True)) + m    # (tn, 1)

    # z[n, k] = sum_j x[n, j] * cls_probs[k, j]  -- single f32 MXU matmul per tile
    z = jnp.dot(x, cpt_ref[...], preferred_element_type=jnp.float32)      # (tn, J)
    w = (1.0 - eta) * x + eta * z                                          # (tn, J)

    # pick the target column of (eta * lse * R - w) with a one-hot compare/select
    col = jax.lax.broadcasted_iota(jnp.int32, (rows, j), 1)
    oh = col == t                                                          # (tn, J)
    sel = eta * (lse * rowsum_ref[...]) - w                                # (tn, J)
    picked = jnp.sum(jnp.where(oh, sel, 0.0), axis=-1, keepdims=True)      # (tn, 1)
    per_sample = (1.0 - eta) * lse + picked    # == lse*sum(y_true) - sum(y_true*x)

    # mask rows beyond the true batch size (ragged last tile; logits are unpadded,
    # so the tail of the block holds unspecified data -- the select zeroes it out)
    base = (c * tiles_per_split + i) * tn
    row_id = jax.lax.broadcasted_iota(jnp.int32, (rows, 1), 0) + base
    per_sample = jnp.where(row_id < n_valid, per_sample, 0.0)

    acc_ref[...] += per_sample                       # pure VPU add every tile

    @pl.when(i == pl.num_programs(1) - 1)
    def _finalize():
        s = jnp.sum(acc_ref[...], axis=0, keepdims=True)   # single cross-sublane reduce
        out_ref[...] = jnp.broadcast_to(s[None], out_ref.shape)   # lane-dense store


def custom_targets_loss(logits, target, cls_probs, eta=1.0, max_block_rows=4096):
    """logits: (N, J) float (any dtype); target: (N,) int; cls_probs: (J, J).

    Returns a float32 scalar matching CustomTargetsLoss(CrossEntropyLoss(), ...).
    """
    n, j = logits.shape
    itemsize = logits.dtype.itemsize

    tn = _choose_tile_rows(n, j, itemsize, max_block_rows)
    if tn >= n:
        tn, num_tiles = n, 1
    else:
        num_tiles = -(-n // tn)          # ragged last tile handled in-kernel

    # Shard row tiles over the two v7x TensorCores when it divides evenly;
    # on single-core chips the leading axis just runs sequentially (no cost).
    num_splits = 2 if (num_tiles % 2 == 0 and num_tiles >= 2) else 1
    tiles_per_split = num_tiles // num_splits

    # Tiny precomputed tables (stay resident in VMEM across the whole grid).
    target_col = target.astype(jnp.int32).reshape(n, 1)
    cp_f32 = jnp.asarray(cls_probs, jnp.float32)
    cpt = cp_f32.T                                        # cpt[j, k] = cls_probs[k, j]
    rowsum = jnp.sum(cp_f32, axis=-1).reshape(1, j)       # R[k] = sum_j cls_probs[k, j]

    kernel = functools.partial(_custom_targets_ce_kernel, eta=float(eta),
                               n_valid=n, tn=tn, tiles_per_split=tiles_per_split)

    ws = _workset_bytes(tn, j, itemsize)
    vmem_limit = int(min(64 << 20, max(32 << 20, ws + (8 << 20))))

    cost = pl.CostEstimate(
        flops=int(2 * n * j * j + 12 * n * j),            # matmul + elementwise
        transcendentals=int(n * (j + 1)),                 # exp per logit + log per row
        bytes_accessed=int(n * j * itemsize + n * 4 + j * j * 4 + j * 4
                           + num_splits * 128 * 4))

    out = pl.pallas_call(
        kernel,
        out_shape=jax.ShapeDtypeStruct((num_splits, 1, 128), jnp.float32),
        grid=(num_splits, tiles_per_split),
        in_specs=[
            pl.BlockSpec((tn, j), lambda c, i: (c * tiles_per_split + i, 0)),  # logits
            pl.BlockSpec((tn, 1), lambda c, i: (c * tiles_per_split + i, 0)),  # target
            pl.BlockSpec((j, j), lambda c, i: (0, 0)),                         # cls_probs^T
            pl.BlockSpec((1, j), lambda c, i: (0, 0)),                         # row sums
        ],
        out_specs=pl.BlockSpec((1, 1, 128), lambda c, i: (c, 0, 0)),
        scratch_shapes=[pltpu.VMEM((tn, 1), jnp.float32)],
        compiler_params=pltpu.CompilerParams(
            dimension_semantics=("parallel", "arbitrary"),
            vmem_limit_bytes=vmem_limit),
        cost_estimate=cost,
    )(logits, target_col, cpt, rowsum)

    # Finish: sum the per-split partials and take the batch mean.
    return jnp.sum(out[:, 0, 0]) / n


def _reference(logits, target, cls_probs, eta):
    # Pure-JAX reference mirroring the PyTorch semantics exactly.
    j = cls_probs.shape[0]
    oh = jax.nn.one_hot(target, j, dtype=jnp.float32)
    y_true = (1.0 - eta) * oh + eta * cls_probs[target].astype(jnp.float32)
    logp = jax.nn.log_softmax(logits.astype(jnp.float32), axis=-1)
    return jnp.mean(-jnp.sum(y_true * logp, axis=-1))


if __name__ == "__main__":
    key = jax.random.PRNGKey(0)
    k1, k2, k3, k4 = jax.random.split(key, 4)

    # Tolerances cover the worst-case MXU f32-matmul pass precision; typical
    # error is ~1e-6 since all in-kernel math is f32.
    TOL = 2e-3

    # --- test 1: small batch, f32 (module-docstring scale), single tile ---
    N, J, eta = 8, 4, 0.5
    logits = jax.random.normal(k1, (N, J), dtype=jnp.float32)
    target = jax.random.randint(k2, (N,), 0, J, dtype=jnp.int32)
    raw = jax.random.uniform(k3, (J, J), dtype=jnp.float32) + 0.1
    cls_probs = raw / jnp.sum(raw, axis=-1, keepdims=True)

    loss = custom_targets_loss(logits, target, cls_probs, eta=eta)
    jax.block_until_ready(loss)
    ref = _reference(logits, target, cls_probs, eta)
    assert jnp.allclose(loss, ref, atol=TOL, rtol=TOL), (loss, ref)

    # --- test 2: multiple row tiles + ragged last tile + 2-way core split +
    #             native bf16 logits (no padding, no wrapper-side dtype cast) ---
    N2, J2, eta2 = 200, 6, 0.3
    logits2 = jax.random.normal(k4, (N2, J2), dtype=jnp.float32).astype(jnp.bfloat16)
    target2 = jax.random.randint(k2, (N2,), 0, J2, dtype=jnp.int32)
    raw2 = jax.random.uniform(k3, (J2, J2), dtype=jnp.float32) + 0.1
    cls_probs2 = raw2 / jnp.sum(raw2, axis=-1, keepdims=True)

    loss2 = custom_targets_loss(logits2, target2, cls_probs2, eta=eta2,
                                max_block_rows=64)
    jax.block_until_ready(loss2)
    ref2 = _reference(logits2.astype(jnp.float32), target2, cls_probs2, eta2)
    assert jnp.allclose(loss2, ref2, atol=TOL, rtol=TOL), (loss2, ref2)

    # TODO(synk): generic pluggable `base_loss` modules (anything other than
    # soft-target CrossEntropyLoss with mean reduction) are not implemented here.

    print("KERNEL_OK")
</pallas_src>

<mosaic_0001>
module attributes {stable_mosaic.version = 11 : i64} {
  func.func @_custom_targets_ce_kernel(%arg0: i32, %arg1: i32, %arg2: memref<8x4xf32, #tpu.memory_space<vmem>>, %arg3: memref<8x1xi32, #tpu.memory_space<vmem>>, %arg4: memref<4x4xf32, #tpu.memory_space<vmem>>, %arg5: memref<1x4xf32, #tpu.memory_space<vmem>>, %arg6: memref<1x1x128xf32, #tpu.memory_space<vmem>>, %arg7: memref<8x1xf32, #tpu.memory_space<vmem>>) attributes {dimension_semantics = [#tpu.dimension_semantics<parallel>, #tpu.dimension_semantics<arbitrary>], iteration_bounds = array<i64: 1, 1>, scalar_prefetch = 0 : i64, scratch_operands = 1 : i64, tpu.core_type = #tpu.core_type<tc>, window_params = [{transform_indices = @transform_0, window_bounds = array<i64: 8, 4>}, {transform_indices = @transform_1, window_bounds = array<i64: 8, 1>}, {pipeline_mode = #tpu.pipeline_mode<synchronous>, transform_indices = @transform_2, window_bounds = array<i64: 4, 4>}, {pipeline_mode = #tpu.pipeline_mode<synchronous>, transform_indices = @transform_3, window_bounds = array<i64: 1, 4>}, {transform_indices = @transform_4, window_bounds = array<i64: 1, 1, 128>}]} {
    %c0_i32 = arith.constant 0 : i32
    %0 = arith.cmpi eq, %arg1, %c0_i32 : i32
    %1 = arith.extui %0 : i1 to i32
    %c0_i32_0 = arith.constant 0 : i32
    %2 = arith.cmpi ne, %1, %c0_i32_0 : i32
    scf.if %2 {
      %cst_24 = arith.constant 0.000000e+00 : f32
      %54 = vector.broadcast %cst_24 : f32 to vector<8x1xf32>
      %c0_25 = arith.constant 0 : index
      %c0_26 = arith.constant 0 : index
      %55 = vector.load %arg7[%c0_25, %c0_26] : memref<8x1xf32, #tpu.memory_space<vmem>>, vector<8x1xf32>
      tpu.vector_store %arg7[%c0_25, %c0_26], %54 {strides = array<i32>} : memref<8x1xf32, #tpu.memory_space<vmem>>, vector<8x1xf32>,
      %cst_27 = arith.constant 0.000000e+00 : f32
      %56 = vector.broadcast %cst_27 : f32 to vector<1x1x128xf32>
      %c0_28 = arith.constant 0 : index
      %c0_29 = arith.constant 0 : index
      %c0_30 = arith.constant 0 : index
      %57 = vector.load %arg6[%c0_28, %c0_29, %c0_30] : memref<1x1x128xf32, #tpu.memory_space<vmem>>, vector<1x1x128xf32>
      tpu.vector_store %arg6[%c0_28, %c0_29, %c0_30], %56 {strides = array<i32>} : memref<1x1x128xf32, #tpu.memory_space<vmem>>, vector<1x1x128xf32>,
    } else {
    }
    %c0 = arith.constant 0 : index
    %c0_1 = arith.constant 0 : index
    %3 = vector.load %arg2[%c0, %c0_1] : memref<8x4xf32, #tpu.memory_space<vmem>>, vector<8x4xf32>
    %c0_2 = arith.constant 0 : index
    %c0_3 = arith.constant 0 : index
    %4 = vector.load %arg3[%c0_2, %c0_3] : memref<8x1xi32, #tpu.memory_space<vmem>>, vector<8x1xi32>
    %cst = arith.constant dense<0xFF800000> : vector<8xf32>
    %5 = vector.multi_reduction <maximumf>, %3, %cst [1] : vector<8x4xf32> to vector<8xf32>
    %6 = vector.shape_cast %5 : vector<8xf32> to vector<8x1xf32>
    %7 = vector.broadcast %6 : vector<8x1xf32> to vector<8x4xf32>
    %8 = arith.subf %3, %7 : vector<8x4xf32>
    %9 = math.exp %8 : vector<8x4xf32>
    %cst_4 = arith.constant dense<0.000000e+00> : vector<8xf32>
    %10 = vector.multi_reduction <add>, %9, %cst_4 [1] : vector<8x4xf32> to vector<8xf32>
    %11 = vector.shape_cast %10 : vector<8xf32> to vector<8x1xf32>
    %12 = math.log %11 : vector<8x1xf32>
    %13 = arith.addf %12, %6 : vector<8x1xf32>
    %c0_5 = arith.constant 0 : index
    %c0_6 = arith.constant 0 : index
    %14 = vector.load %arg4[%c0_5, %c0_6] : memref<4x4xf32, #tpu.memory_space<vmem>>, vector<4x4xf32>
    %cst_7 = arith.constant dense<0.000000e+00> : vector<8x4xf32>
    %15 = tpu.matmul %3, %14, %cst_7 {dimension_numbers = #tpu.dot_dimension_numbers<[1], [0], [0], [1], [0, 0, 1, 1], [], []>} : vector<8x4xf32>, vector<4x4xf32>, vector<8x4xf32> -> vector<8x4xf32>
    %cst_8 = arith.constant 5.000000e-01 : f32
    %16 = vector.broadcast %cst_8 : f32 to vector<8x4xf32>
    %17 = arith.mulf %16, %3 : vector<8x4xf32>
    %cst_9 = arith.constant 5.000000e-01 : f32
    %18 = vector.broadcast %cst_9 : f32 to vector<8x4xf32>
    %19 = arith.mulf %18, %15 : vector<8x4xf32>
    %20 = arith.addf %17, %19 : vector<8x4xf32>
    %21 = tpu.iota {dimensions = array<i32: 1>} : vector<8x4xi32>
    %22 = vector.broadcast %4 : vector<8x1xi32> to vector<8x4xi32>
    %23 = arith.cmpi eq, %21, %22 : vector<8x4xi32>
    %c0_10 = arith.constant 0 : index
    %c0_11 = arith.constant 0 : index
    %24 = vector.load %arg5[%c0_10, %c0_11] : memref<1x4xf32, #tpu.memory_space<vmem>>, vector<1x4xf32>
    %25 = vector.broadcast %13 : vector<8x1xf32> to vector<8x4xf32>
    %26 = vector.broadcast %24 : vector<1x4xf32> to vector<8x4xf32>
    %27 = arith.mulf %25, %26 : vector<8x4xf32>
    %cst_12 = arith.constant 5.000000e-01 : f32
    %28 = vector.broadcast %cst_12 : f32 to vector<8x4xf32>
    %29 = arith.mulf %28, %27 : vector<8x4xf32>
    %30 = arith.subf %29, %20 : vector<8x4xf32>
    %cst_13 = arith.constant 0.000000e+00 : f32
    %31 = vector.broadcast %cst_13 : f32 to vector<8x4xf32>
    %32 = arith.select %23, %30, %31 : vector<8x4xi1>, vector<8x4xf32>
    %cst_14 = arith.constant dense<0.000000e+00> : vector<8xf32>
    %33 = vector.multi_reduction <add>, %32, %cst_14 [1] : vector<8x4xf32> to vector<8xf32>
    %34 = vector.shape_cast %33 : vector<8xf32> to vector<8x1xf32>
    %cst_15 = arith.constant 5.000000e-01 : f32
    %35 = vector.broadcast %cst_15 : f32 to vector<8x1xf32>
    %36 = arith.mulf %35, %13 : vector<8x1xf32>
    %37 = arith.addf %36, %34 : vector<8x1xf32>
    %c1_i32 = arith.constant 1 : i32
    %38 = arith.muli %arg0, %c1_i32 : i32
    %39 = arith.addi %38, %arg1 : i32
    %c8_i32 = arith.constant 8 : i32
    %40 = arith.muli %39, %c8_i32 : i32
    %41 = tpu.iota {dimensions = array<i32: 0>} : vector<8x1xi32>
    %42 = vector.broadcast %40 : i32 to vector<8x1xi32>
    %43 = arith.addi %41, %42 : vector<8x1xi32>
    %c8_i32_16 = arith.constant 8 : i32
    %44 = vector.broadcast %c8_i32_16 : i32 to vector<8x1xi32>
    %45 = arith.cmpi slt, %43, %44 : vector<8x1xi32>
    %cst_17 = arith.constant 0.000000e+00 : f32
    %46 = vector.broadcast %cst_17 : f32 to vector<8x1xf32>
    %47 = arith.select %45, %37, %46 : vector<8x1xi1>, vector<8x1xf32>
    %c0_18 = arith.constant 0 : index
    %c0_19 = arith.constant 0 : index
    %48 = vector.load %arg7[%c0_18, %c0_19] : memref<8x1xf32, #tpu.memory_space<vmem>>, vector<8x1xf32>
    %49 = arith.addf %48, %47 : vector<8x1xf32>
    %c0_20 = arith.constant 0 : index
    %c0_21 = arith.constant 0 : index
    %50 = vector.load %arg7[%c0_20, %c0_21] : memref<8x1xf32, #tpu.memory_space<vmem>>, vector<8x1xf32>
    tpu.vector_store %arg7[%c0_20, %c0_21], %49 {strides = array<i32>} : memref<8x1xf32, #tpu.memory_space<vmem>>, vector<8x1xf32>,
    %c0_i32_22 = arith.constant 0 : i32
    %51 = arith.cmpi eq, %arg1, %c0_i32_22 : i32
    %52 = arith.extui %51 : i1 to i32
    %c0_i32_23 = arith.constant 0 : i32
    %53 = arith.cmpi ne, %52, %c0_i32_23 : i32
    scf.if %53 {
      %c0_24 = arith.constant 0 : index
      %c0_25 = arith.constant 0 : index
      %54 = vector.load %arg7[%c0_24, %c0_25] : memref<8x1xf32, #tpu.memory_space<vmem>>, vector<8x1xf32>
      %cst_26 = arith.constant dense<0.000000e+00> : vector<1xf32>
      %55 = vector.multi_reduction <add>, %54, %cst_26 [0] : vector<8x1xf32> to vector<1xf32>
      %56 = vector.shape_cast %55 : vector<1xf32> to vector<1x1xf32>
      %57 = vector.shape_cast %56 : vector<1x1xf32> to vector<1x1x1xf32>
      %58 = vector.shape_cast %57 : vector<1x1x1xf32> to vector<1x1x1xf32>
      %59 = vector.broadcast %58 : vector<1x1x1xf32> to vector<1x1x128xf32>
      %c0_27 = arith.constant 0 : index
      %c0_28 = arith.constant 0 : index
      %c0_29 = arith.constant 0 : index
      %60 = vector.load %arg6[%c0_27, %c0_28, %c0_29] : memref<1x1x128xf32, #tpu.memory_space<vmem>>, vector<1x1x128xf32>
      tpu.vector_store %arg6[%c0_27, %c0_28, %c0_29], %59 {strides = array<i32>} : memref<1x1x128xf32, #tpu.memory_space<vmem>>, vector<1x1x128xf32>,
    } else {
    }
    return
  }
  func.func @transform_0(%arg0: i32, %arg1: i32) -> (i32, i32) {
    %c1_i32 = arith.constant 1 : i32
    %0 = arith.muli %arg0, %c1_i32 : i32
    %1 = arith.addi %0, %arg1 : i32
    %c0_i32 = arith.constant 0 : i32
    %c0_i32_0 = arith.constant 0 : i32
    return %1, %c0_i32 : i32, i32
  }
  func.func @transform_1(%arg0: i32, %arg1: i32) -> (i32, i32) {
    %c1_i32 = arith.constant 1 : i32
    %0 = arith.muli %arg0, %c1_i32 : i32
    %1 = arith.addi %0, %arg1 : i32
    %c0_i32 = arith.constant 0 : i32
    %c0_i32_0 = arith.constant 0 : i32
    return %1, %c0_i32 : i32, i32
  }
  func.func @transform_2(%arg0: i32, %arg1: i32) -> (i32, i32) {
    %c0_i32 = arith.constant 0 : i32
    %c0_i32_0 = arith.constant 0 : i32
    %c0_i32_1 = arith.constant 0 : i32
    return %c0_i32, %c0_i32_0 : i32, i32
  }
  func.func @transform_3(%arg0: i32, %arg1: i32) -> (i32, i32) {
    %c0_i32 = arith.constant 0 : i32
    %c0_i32_0 = arith.constant 0 : i32
    %c0_i32_1 = arith.constant 0 : i32
    return %c0_i32, %c0_i32_0 : i32, i32
  }
  func.func @transform_4(%arg0: i32, %arg1: i32) -> (i32, i32, i32) {
    %c0_i32 = arith.constant 0 : i32
    %c0_i32_0 = arith.constant 0 : i32
    %c0_i32_1 = arith.constant 0 : i32
    return %arg0, %c0_i32, %c0_i32_0 : i32, i32, i32
  }
}

</mosaic_0001>

<llo_original>
// kernel: tpu_custom_call.1
$region0: #{tpu_custom_call.1}
  #allocation0 [shape = 'u32[]', space=smem, size = 0x4, offset = 0x4, fixed_abs, tag = 'smem constant byte address 0x4 - core index']
  #allocation1 [shape = 'u32[72,128]{1,0:T(1,128)}', space=vmem, size = 0x9000, scoped, tag = 'internal scratch']
  #allocation2 [shape = 'f32[8,1]{1,0:T(8,128)}', space=vmem, size = 0x1000, scoped, tag = 'scratch operand']
  %s0 = inlined_call_operand.vmem [shape: f32[8,4], index: 0, kind: input, shape index: {}]
  %s1 = inlined_call_operand.vmem [shape: s32[8,1], index: 1, kind: input, shape index: {}]
  %s2 = inlined_call_operand.vmem [shape: f32[4,4], index: 2, kind: input, shape index: {}]
  %s3 = inlined_call_operand.vmem [shape: f32[1,4], index: 3, kind: input, shape index: {}]
  %s4 = inlined_call_operand.hbm [shape: f32[1,1,128], index: 4, kind: output, shape index: {}]
  %s5 = sld [smem:[#allocation0]]
  $region34: #{tpu_custom_call.1} parent=0
    _
  %s7 = ssub.s32 1, %s5
  %s8 = scalar_select 0, %s7, %s5
  $region1: #{tpu_custom_call.1} parent=0
    #allocation3 [shape = 'u8[512]{0}', space=vmem, size = 0x400, scoped, tag = 'output window, operand 0, single buffered']
    #allocation4 [shape = 's32[1]{0}', space=sflag, size = 0x4, scoped, tag = 'scoped memory for tpu_custom_call.1']
    %9 = vsyncpa [#allocation4], 0
    // Predicated region
    $region2: #{tpu_custom_call.1} parent=1 // pred_check
      _
    $region3: #{tpu_custom_call.1} parent=1 // pred_check_branch
      %11 = sbr.rel (0) target = $region5
    $region4: #{tpu_custom_call.1} parent=1 // pred_region
      %s12 = sadd.s32 0, 0
      %p13 = scmp.lt.s32.totalorder %s12, 0
      %s14 = scalar_select %p13, %s12, 0
      %s15 = smul.addr %s14, 8
      %s16 = scalar_lea.vmem %s0, %s15
      %s17 = sadd.s32 0, 0
    $region5: #{tpu_custom_call.1} parent=1 // pred_fallthru
      _
    // Predicated region
    $region6: #{tpu_custom_call.1} parent=1 // pred_check
      _
    $region7: #{tpu_custom_call.1} parent=1 // pred_check_branch
      %19 = sbr.rel (0) target = $region9
    $region8: #{tpu_custom_call.1} parent=1 // pred_region
      %s20 = sadd.s32 0, 0
      %p21 = scmp.lt.s32.totalorder %s20, 0
      %s22 = scalar_select %p21, %s20, 0
      %s23 = smul.addr %s22, 8
      %s24 = scalar_lea.vmem %s1, %s23
      %s25 = sadd.s32 0, 0
    $region9: #{tpu_custom_call.1} parent=1 // pred_fallthru
      _
    // Predicated region
    $region10: #{tpu_custom_call.1} parent=1 // pred_check
      _
    $region11: #{tpu_custom_call.1} parent=1 // pred_check_branch
      %27 = sbr.rel (0) target = $region13
    $region12: #{tpu_custom_call.1} parent=1 // pred_region
      _
    $region13: #{tpu_custom_call.1} parent=1 // pred_fallthru
      _
    // Predicated region
    $region14: #{tpu_custom_call.1} parent=1 // pred_check
      _
    $region15: #{tpu_custom_call.1} parent=1 // pred_check_branch
      %29 = sbr.rel (0) target = $region17
    $region16: #{tpu_custom_call.1} parent=1 // pred_region
      _
    $region17: #{tpu_custom_call.1} parent=1 // pred_fallthru
      _
    %s30 = sadd.s32 0, 0
    %p31 = scmp.lt.s32.totalorder %s30, 0
    %s32 = scalar_select %p31, %s30, 0
    %s33 = smul.addr %s32, 8
    %s34 = scalar_lea.vmem %s0, %s33
    %s35 = sadd.s32 0, 0
    %p36 = scmp.lt.s32.totalorder %s35, 0
    %s37 = scalar_select %p36, %s35, 0
    %s38 = smul.addr %s37, 8
    %s39 = scalar_lea.vmem %s1, %s38
    %s40 = sadd.s32 0, 0
    %p41 = scmp.lt.s32.totalorder %s40, 0
    %s42 = scalar_select %p41, %s40, 0
    %s43 = smul.addr %s42, 8
    %s44 = scalar_lea.vmem %s0, %s43
    %s45 = sadd.s32 0, 0
    %s46 = sadd.s32 0, 0
    %p47 = scmp.lt.s32.totalorder %s46, 0
    %s48 = scalar_select %p47, %s46, 0
    %s49 = smul.addr %s48, 8
    %s50 = scalar_lea.vmem %s1, %s49
    %s51 = sadd.s32 0, 0
    %p52 = scmp.eq.s32.totalorder 0, 0
    // Predicated region
    $region18: #{tpu_custom_call.1} parent=1 // pred_check
      %p53 = pneg %p52
    $region19: #{tpu_custom_call.1} parent=1 // pred_check_branch
      %55 = sbr.rel (%p53) target = $region21
    $region20: #{tpu_custom_call.1} parent=1 // pred_region
      %vm56 = vcmask 7168
      %57 = vst.msk [vmem:[#allocation2] sm:$0xff] %vm56, 0.0
      %58 = vst [vmem:[#allocation3] sm:$0x1] 0.0
    $region21: #{tpu_custom_call.1} parent=1 // pred_fallthru
      _
    %v59 = vld [vmem:[%s44] sm:$0xff]
    %v60 = vld [vmem:[%s50] sm:$0xff]
    %vm61 = vcmask 31744
    %v62 = vsel %vm61, %v59, -inf
    %63 = vmax.xlane.f32.xlu0 %v62
    %v64 = vpop.xlane.xlu0 %63
    %v65 = vsub.f32 %v59, %v64
    %v66 = vmul.f32 %v65, 1.442695
    %v67 = vpow.pop %v66
    %v68 = vsel %vm61, %v67, 0.0
    %69 = vadd.xlane.f32.xlu0 %v68
    %v70 = vpop.xlane.xlu0 %69
    %v71 = vlog2.pop %v70
    %v72 = vmul.f32 %v71, 0.6931472
    %v73 = vadd.f32 %v72, %v64
    %v74 = vld [vmem:[%s2] sm:$0xf]
    %v76 = vsel %vm61, %v59, 0
    %vm78 = vcmask 1043456
    %v80 = vsel %vm78, %v74, 0
    %82 = vmatpush.msra.mxu0 0.0
    %83 = vmatpush.msra.mxu0 0.0
    %84 = vmatpush.msra.mxu0 0.0
    %85 = vmatpush.msra.mxu0 0.0
    %86 = vmatpush.msra.mxu0 0.0
    %87 = vmatpush.msra.mxu0 0.0
    %88 = vmatpush.msra.mxu0 0.0
    %89 = vmatpush.msra.mxu0 0.0
    %90 = vmatpush.msra.mxu0 0.0
    %91 = vmatpush.msra.mxu0 0.0
    %92 = vmatpush.msra.mxu0 0.0
    %93 = vmatpush.msra.mxu0 0.0
    %94 = vmatpush.msra.mxu0 0.0
    %95 = vmatpush.msra.mxu0 0.0
    %96 = vmatpush.msra.mxu0 0.0
    %97 = vmatpush.msra.mxu0 %v80
    %98 = vmatmul.f32.gmra.mxu0 %v76
    %v99 = vpop.f32.mrf.mxu0
    %v100 = vadd.f32 0.0, %v99
    %101 = vdwg.mxu0
    %v102 = vmul.f32 %v59, 0.5
    %v103 = vmul.f32 %v100, 0.5
    %v104 = vadd.f32 %v102, %v103
    %v105 = vlaneseq
    %v106 = vand.u32 %v105, 127
    %107 = vset.pattern.permute.xlu0 0
    %108 = vperm.xlu0 %107, %v60
    %v109 = vpop.permute.xlu0 %108
    %vm110 = vcmp.eq.s32.totalorder %v106, %v109
    %v111 = vld [vmem:[%s3] sm:$0x1]
    %v113 = vperm.slane %v111, 0
    %v115 = vmul.f32 %v73, %v113
    %v116 = vmul.f32 %v115, 0.5
    %v117 = vsub.f32 %v116, %v104
    %v118 = vsel %vm110, %v117, 0.0
    %v119 = vsel %vm61, %v118, 0.0
    %120 = vadd.xlane.f32.xlu0 %v119
    %v121 = vpop.xlane.xlu0 %120
    %v122 = vmul.f32 %v73, 0.5
    %v123 = vadd.f32 %v122, %v121
    %s124 = sadd.s32 0, 0
    %s125 = smul.u32 %s124, 8
    %v126 = vlaneseq
    %v127 = vshrl.u32 %v126, 7
    %v128 = vstv %s125
    %v129 = vadd.s32 %v127, %v128
    %vm130 = vcmp.lt.s32.totalorder %v129, 8
    %v131 = vsel %vm130, %v123, 0.0
    %v132 = vld [vmem:[#allocation2] sm:$0xff]
    %v133 = vadd.f32 %v132, %v131
    %vm134 = vcmask 7168
    %135 = vst.msk [vmem:[#allocation2] sm:$0xff] %vm134, %v133
    // Predicated region
    $region22: #{tpu_custom_call.1} parent=1 // pred_check
      %p136 = pneg %p52
    $region23: #{tpu_custom_call.1} parent=1 // pred_check_branch
      %138 = sbr.rel (%p136) target = $region25
    $region24: #{tpu_custom_call.1} parent=1 // pred_region
      %v139 = vld [vmem:[#allocation2] sm:$0xff]
      %v140 = vsel %vm134, %v139, 0.0
      %v141 = vrot.slane %v140, 4
      %v142 = vadd.f32 %v140, %v141
      %v143 = vrot.slane %v142, 2
      %v144 = vadd.f32 %v142, %v143
      %v145 = vrot.slane %v144, 1
      %v146 = vadd.f32 %v144, %v145
      %148 = vset.pattern.permute.xlu0 0
      %149 = vperm.xlu0 %148, %v146
      %v150 = vpop.permute.xlu0 %149
      %152 = vst [vmem:[#allocation3] sm:$0x1] %v150
    $region25: #{tpu_custom_call.1} parent=1 // pred_fallthru
      _
    // Predicated region
    $region26: #{tpu_custom_call.1} parent=1 // pred_check
      _
    $region27: #{tpu_custom_call.1} parent=1 // pred_check_branch
      %154 = sbr.rel (0) target = $region29
    $region28: #{tpu_custom_call.1} parent=1 // pred_region
      %156 = vsyncadd [#allocation4], 0
      %s158 = sshll.u32 [#allocation3], 4
      %s159 = int_to_ptr.vmem [resolvable:$true] %s158
      %s160 = sshll.u32 %s4, 4
      %s161 = int_to_ptr.hbm [resolvable:$true] %s160
      %163 = dma.vmem_to_hbm [thread:$0]  %s159, 16, %s161, [#allocation4]
    $region29: #{tpu_custom_call.1} parent=1 // pred_fallthru
      _
    // Predicated region
    $region30: #{tpu_custom_call.1} parent=1 // pred_check
      _
    $region31: #{tpu_custom_call.1} parent=1 // pred_check_branch
      %165 = sbr.rel (0) target = $region33
    $region32: #{tpu_custom_call.1} parent=1 // pred_region
      %167 = dma.done [#allocation4], 16
    $region33: #{tpu_custom_call.1} parent=1 // pred_fallthru
      _
    %168 = vsyncpa [#allocation4], 1

</llo_original>
